<compile_context>
chip_gen: v7x
topology: tpu7x:2x2x1
jax: 0.10.0
libtpu: 0.0.40
codegen_flags: <defaults>
</compile_context>

<pallas_src>
import numpy as np

import jax
import jax.numpy as jnp
from jax.experimental import pallas as pl
from jax.experimental.pallas import tpu as pltpu

# ---- color-space weight matrices (deterministic, from the module) ----
RGB_TO_LHM = np.array([[0.2989, 0.587, 0.114],
                       [0.3,    0.04, -0.35],
                       [0.34,  -0.6,   0.17]], dtype=np.float32)

RGB_TO_LMN = np.array([[0.06,   0.63,  0.27],
                       [0.3,    0.04, -0.35],
                       [0.34,  -0.6,   0.17]], dtype=np.float32)

RGB_TO_YIQ = np.array([[0.299,   0.587,   0.114],
                       [0.5969, -0.2746, -0.3213],
                       [0.2115, -0.5227,  0.3112]], dtype=np.float32)

_WEIGHTS = {
    ("RGB", "YIQ"): RGB_TO_YIQ,
    ("RGB", "Y"):   RGB_TO_YIQ[:1],
    ("RGB", "LHM"): RGB_TO_LHM,
    ("RGB", "LMN"): RGB_TO_LMN,
    ("RGB", "L"):   RGB_TO_LMN[:1],
}


# ---------------------------------------------------------------------------
# Kernel factories (weights / bias baked in as Python constants)
# ---------------------------------------------------------------------------
def _make_dense_kernel(weight, bias):
    """Kernel for the (1, C, ROWS, 128) lane+sublane-dense layout."""
    Cp, C = weight.shape
    w = [[float(weight[i, j]) for j in range(C)] for i in range(Cp)]
    b = None if bias is None else [float(bias[i]) for i in range(Cp)]

    def kernel(x_ref, o_ref):
        # x_ref: (1, C, ROWS, 128)  o_ref: (1, Cp, ROWS, 128)
        xs = [x_ref[0, c].astype(jnp.float32) for c in range(C)]   # dense slabs
        for cp in range(Cp):                                       # unrolled VPU mix
            acc = w[cp][0] * xs[0]
            for c in range(1, C):
                acc = acc + w[cp][c] * xs[c]
            if b is not None:
                acc = acc + b[cp]
            o_ref[0, cp] = acc.astype(o_ref.dtype)                 # direct per-channel store

    return kernel


def _make_rowmajor_kernel(weight, bias):
    """Fallback kernel for the (1, C, TS) layout (S not a multiple of 128)."""
    Cp, C = weight.shape
    w = [[float(weight[i, j]) for j in range(C)] for i in range(Cp)]
    b = None if bias is None else [float(bias[i]) for i in range(Cp)]

    def kernel(x_ref, o_ref):
        # x_ref: (1, C, TS)  o_ref: (1, Cp, TS)
        x = x_ref[0].astype(jnp.float32)                           # (C, TS)
        for cp in range(Cp):
            acc = w[cp][0] * x[0:1, :]
            for c in range(1, C):
                acc = acc + w[cp][c] * x[c:c + 1, :]
            if b is not None:
                acc = acc + b[cp]
            o_ref[0, cp:cp + 1, :] = acc.astype(o_ref.dtype)       # no concatenate

    return kernel


# ---------------------------------------------------------------------------
# Tile / VMEM planning
# ---------------------------------------------------------------------------
def _sublane_multiple(itemsize):
    # native sublane packing: 8 rows for 4-byte, 16 for 2-byte, 32 for 1-byte
    return max(8, 32 // max(1, itemsize))


def _vmem_plan():
    """Per-generation VMEM limit and per-step (in+out, single-buffered) budget."""
    cap = 64 << 20
    try:
        info = pltpu.get_tpu_info()
        cap = int(getattr(info, "vmem_capacity_bytes", 0)) or cap
    except Exception:
        pass
    if cap >= (100 << 20):            # v5e / v6e: 128 MiB physical VMEM
        limit = 64 << 20
    else:                             # v7x: 64 MiB per TensorCore
        limit = min(cap, 48 << 20)
    block_budget = limit // 4         # double-buffered footprint stays <= limit / 2
    return limit, block_budget


def _pick_row_tile(R, C, Cp, itemsize, block_budget):
    """Rows of 128 lanes per block for the dense (N, C, R, 128) layout."""
    mult = _sublane_multiple(itemsize)
    row_bytes = (C + Cp) * 128 * itemsize          # in + out bytes per 128-lane row
    rows = max(1, block_budget // row_bytes)
    rows = max(mult, (rows // mult) * mult)
    if rows >= R:
        return R                                    # full extent: always legal
    # Prefer a divisor of R (no masked tail), but never shrink below ~512 rows.
    floor = max(mult, min(rows, 512))
    cand = rows
    while cand >= floor:
        if R % cand == 0:
            return cand
        cand -= mult
    return rows                                     # ragged tail -> masked by Pallas


def _pick_spatial_tile(S, C, Cp, itemsize, block_budget):
    """Lane tile for the fallback (N, C, S) layout; accounts for sublane padding."""
    mult = _sublane_multiple(itemsize)
    pad = lambda c: ((c + mult - 1) // mult) * mult
    col_bytes = (pad(C) + pad(Cp)) * itemsize       # padded in + out bytes per lane column
    ts = max(128, (block_budget // col_bytes // 128) * 128)
    if ts >= S:
        return S                                    # small image: full extent is legal
    return ts                                       # ragged last block -> masked by Pallas


# ---------------------------------------------------------------------------
# Public wrapper
# ---------------------------------------------------------------------------
def color_conv(x, weight, bias=None, *, tile_rows=None, tile_spatial=None):
    """Pallas equivalent of piqa's color_conv.

    Args:
      x: (N, C, *) float array (channel-first, same as PyTorch).
      weight: (C', C) concrete (host) weight matrix.
      bias: optional (C',) concrete bias vector.
      tile_rows / tile_spatial: optional manual tile overrides (dense / fallback path).
    Returns:
      (N, C', *) array with x's dtype.
    """
    N, C = x.shape[0], x.shape[1]
    spatial = x.shape[2:]
    S = 1
    for d in spatial:
        S *= int(d)

    weight = np.asarray(weight, dtype=np.float32)
    Cp = weight.shape[0]
    assert weight.shape[1] == C
    bias_np = None if bias is None else np.asarray(bias, dtype=np.float32)

    itemsize = jnp.dtype(x.dtype).itemsize
    vmem_limit, block_budget = _vmem_plan()

    bytes_accessed = (N * C * S + N * Cp * S) * itemsize
    cost = pl.CostEstimate(flops=2 * N * S * C * Cp,
                           transcendentals=0,
                           bytes_accessed=bytes_accessed)

    if S >= 128 and S % 128 == 0:
        # ---- dense path: (N, C, R, 128) view, fully dense vreg tiles ----
        R = S // 128
        rows = tile_rows if tile_rows is not None else _pick_row_tile(
            R, C, Cp, itemsize, block_budget)
        x_in = x.reshape(N, C, R, 128)              # free reshape in NCHW
        grid = (N, pl.cdiv(R, rows))
        kernel = _make_dense_kernel(weight, bias_np)
        in_specs = [pl.BlockSpec((1, C, rows, 128), lambda n, s: (n, 0, s, 0))]
        out_specs = pl.BlockSpec((1, Cp, rows, 128), lambda n, s: (n, 0, s, 0))
        out_shape = jax.ShapeDtypeStruct((N, Cp, R, 128), x.dtype)
    else:
        # ---- fallback path: (N, C, S) view, bounded lane tiles ----
        # TODO(synk): sublane occupancy is C/8 here; only hit when S % 128 != 0.
        ts = tile_spatial if tile_spatial is not None else _pick_spatial_tile(
            S, C, Cp, itemsize, block_budget)
        x_in = x.reshape(N, C, S)
        grid = (N, pl.cdiv(S, ts))
        kernel = _make_rowmajor_kernel(weight, bias_np)
        in_specs = [pl.BlockSpec((1, C, ts), lambda n, s: (n, 0, s))]
        out_specs = pl.BlockSpec((1, Cp, ts), lambda n, s: (n, 0, s))
        out_shape = jax.ShapeDtypeStruct((N, Cp, S), x.dtype)

    y = pl.pallas_call(
        kernel,
        out_shape=out_shape,
        grid_spec=pltpu.PrefetchScalarGridSpec(
            num_scalar_prefetch=0,
            grid=grid,
            in_specs=in_specs,
            out_specs=out_specs,
        ),
        compiler_params=pltpu.CompilerParams(
            dimension_semantics=("parallel", "parallel"),
            vmem_limit_bytes=vmem_limit,
        ),
        cost_estimate=cost,
    )(x_in)

    return y.reshape((N, Cp) + spatial)


class ColorConv:
    """JAX/Pallas port of piqa's ColorConv module (forward only, no bias)."""

    def __init__(self, src: str, dst: str):
        assert (src, dst) in _WEIGHTS, f"Unknown {src} to {dst} conversion"
        self.weight = _WEIGHTS[(src, dst)]

    def __call__(self, x):
        return color_conv(x, self.weight)


if __name__ == "__main__":
    key = jax.random.PRNGKey(0)
    W_YIQ = jnp.asarray(RGB_TO_YIQ)

    # 1) RGB -> YIQ, dense path (S = 256 is a multiple of 128)
    x = jax.random.uniform(key, (2, 3, 16, 16), dtype=jnp.float32)
    y = ColorConv("RGB", "YIQ")(x)
    y = jax.block_until_ready(y)
    ref = jnp.einsum("nchw,dc->ndhw", x, W_YIQ)
    assert y.shape == (2, 3, 16, 16)
    assert jnp.allclose(y, ref, atol=1e-5), float(jnp.max(jnp.abs(y - ref)))

    # 2) RGB -> Y (Cp = 1, single-output-channel path)
    y1 = ColorConv("RGB", "Y")(x)
    y1 = jax.block_until_ready(y1)
    ref1 = jnp.einsum("nchw,dc->ndhw", x, W_YIQ[:1])
    assert y1.shape == (2, 1, 16, 16)
    assert jnp.allclose(y1, ref1, atol=1e-5), float(jnp.max(jnp.abs(y1 - ref1)))

    # 3) RGB -> LHM with odd spatial extent (S = 132, not a multiple of 128):
    #    exercises the fallback layout.
    x_odd = jax.random.uniform(jax.random.PRNGKey(1), (2, 3, 12, 11),
                               dtype=jnp.float32)
    y_odd = ColorConv("RGB", "LHM")(x_odd)
    y_odd = jax.block_until_ready(y_odd)
    ref_odd = jnp.einsum("nchw,dc->ndhw", x_odd, jnp.asarray(RGB_TO_LHM))
    assert y_odd.shape == (2, 3, 12, 11)
    assert jnp.allclose(y_odd, ref_odd, atol=1e-5)

    # 4) Multi-step pipelined dense grid (R = 32 rows, 16-row tiles -> 2 steps)
    x_big = jax.random.uniform(jax.random.PRNGKey(2), (1, 3, 32, 128),
                               dtype=jnp.float32)
    y_big = color_conv(x_big, RGB_TO_YIQ, tile_rows=16)
    y_big = jax.block_until_ready(y_big)
    ref_big = jnp.einsum("nchw,dc->ndhw", x_big, W_YIQ)
    assert jnp.allclose(y_big, ref_big, atol=1e-5)

    print("KERNEL_OK")
</pallas_src>

<mosaic_0001>
module attributes {stable_mosaic.version = 11 : i64} {
  func.func @kernel(%arg0: i32, %arg1: i32, %arg2: memref<1x3x2x128xf32, #tpu.memory_space<vmem>>, %arg3: memref<1x3x2x128xf32, #tpu.memory_space<vmem>>) attributes {dimension_semantics = [#tpu.dimension_semantics<parallel>, #tpu.dimension_semantics<parallel>], iteration_bounds = array<i64: 2, 1>, scalar_prefetch = 0 : i64, scratch_operands = 0 : i64, tpu.core_type = #tpu.core_type<tc>, window_params = [{transform_indices = @transform_0, window_bounds = array<i64: 1, 3, 2, 128>}, {transform_indices = @transform_1, window_bounds = array<i64: 1, 3, 2, 128>}]} {
    %c0 = arith.constant 0 : index
    %c0_0 = arith.constant 0 : index
    %c0_1 = arith.constant 0 : index
    %c0_2 = arith.constant 0 : index
    %0 = vector.load %arg2[%c0, %c0_0, %c0_1, %c0_2] : memref<1x3x2x128xf32, #tpu.memory_space<vmem>>, vector<1x1x2x128xf32>
    %1 = vector.shape_cast %0 : vector<1x1x2x128xf32> to vector<2x128xf32>
    %c0_3 = arith.constant 0 : index
    %c1 = arith.constant 1 : index
    %c0_4 = arith.constant 0 : index
    %c0_5 = arith.constant 0 : index
    %2 = vector.load %arg2[%c0_3, %c1, %c0_4, %c0_5] : memref<1x3x2x128xf32, #tpu.memory_space<vmem>>, vector<1x1x2x128xf32>
    %3 = vector.shape_cast %2 : vector<1x1x2x128xf32> to vector<2x128xf32>
    %c0_6 = arith.constant 0 : index
    %c2 = arith.constant 2 : index
    %c0_7 = arith.constant 0 : index
    %c0_8 = arith.constant 0 : index
    %4 = vector.load %arg2[%c0_6, %c2, %c0_7, %c0_8] : memref<1x3x2x128xf32, #tpu.memory_space<vmem>>, vector<1x1x2x128xf32>
    %5 = vector.shape_cast %4 : vector<1x1x2x128xf32> to vector<2x128xf32>
    %cst = arith.constant 2.990000e-01 : f32
    %6 = vector.broadcast %cst : f32 to vector<2x128xf32>
    %7 = arith.mulf %6, %1 : vector<2x128xf32>
    %cst_9 = arith.constant 5.870000e-01 : f32
    %8 = vector.broadcast %cst_9 : f32 to vector<2x128xf32>
    %9 = arith.mulf %8, %3 : vector<2x128xf32>
    %10 = arith.addf %7, %9 : vector<2x128xf32>
    %cst_10 = arith.constant 1.140000e-01 : f32
    %11 = vector.broadcast %cst_10 : f32 to vector<2x128xf32>
    %12 = arith.mulf %11, %5 : vector<2x128xf32>
    %13 = arith.addf %10, %12 : vector<2x128xf32>
    %c0_11 = arith.constant 0 : index
    %c0_12 = arith.constant 0 : index
    %c0_13 = arith.constant 0 : index
    %c0_14 = arith.constant 0 : index
    %14 = vector.load %arg3[%c0_11, %c0_12, %c0_13, %c0_14] : memref<1x3x2x128xf32, #tpu.memory_space<vmem>>, vector<1x1x2x128xf32>
    %15 = vector.shape_cast %14 : vector<1x1x2x128xf32> to vector<2x128xf32>
    %16 = vector.shape_cast %13 : vector<2x128xf32> to vector<1x1x2x128xf32>
    tpu.vector_store %arg3[%c0_11, %c0_12, %c0_13, %c0_14], %16 {strides = array<i32>} : memref<1x3x2x128xf32, #tpu.memory_space<vmem>>, vector<1x1x2x128xf32>,
    %cst_15 = arith.constant 5.969000e-01 : f32
    %17 = vector.broadcast %cst_15 : f32 to vector<2x128xf32>
    %18 = arith.mulf %17, %1 : vector<2x128xf32>
    %cst_16 = arith.constant -2.746000e-01 : f32
    %19 = vector.broadcast %cst_16 : f32 to vector<2x128xf32>
    %20 = arith.mulf %19, %3 : vector<2x128xf32>
    %21 = arith.addf %18, %20 : vector<2x128xf32>
    %cst_17 = arith.constant -3.213000e-01 : f32
    %22 = vector.broadcast %cst_17 : f32 to vector<2x128xf32>
    %23 = arith.mulf %22, %5 : vector<2x128xf32>
    %24 = arith.addf %21, %23 : vector<2x128xf32>
    %c0_18 = arith.constant 0 : index
    %c1_19 = arith.constant 1 : index
    %c0_20 = arith.constant 0 : index
    %c0_21 = arith.constant 0 : index
    %25 = vector.load %arg3[%c0_18, %c1_19, %c0_20, %c0_21] : memref<1x3x2x128xf32, #tpu.memory_space<vmem>>, vector<1x1x2x128xf32>
    %26 = vector.shape_cast %25 : vector<1x1x2x128xf32> to vector<2x128xf32>
    %27 = vector.shape_cast %24 : vector<2x128xf32> to vector<1x1x2x128xf32>
    tpu.vector_store %arg3[%c0_18, %c1_19, %c0_20, %c0_21], %27 {strides = array<i32>} : memref<1x3x2x128xf32, #tpu.memory_space<vmem>>, vector<1x1x2x128xf32>,
    %cst_22 = arith.constant 2.115000e-01 : f32
    %28 = vector.broadcast %cst_22 : f32 to vector<2x128xf32>
    %29 = arith.mulf %28, %1 : vector<2x128xf32>
    %cst_23 = arith.constant -5.227000e-01 : f32
    %30 = vector.broadcast %cst_23 : f32 to vector<2x128xf32>
    %31 = arith.mulf %30, %3 : vector<2x128xf32>
    %32 = arith.addf %29, %31 : vector<2x128xf32>
    %cst_24 = arith.constant 3.112000e-01 : f32
    %33 = vector.broadcast %cst_24 : f32 to vector<2x128xf32>
    %34 = arith.mulf %33, %5 : vector<2x128xf32>
    %35 = arith.addf %32, %34 : vector<2x128xf32>
    %c0_25 = arith.constant 0 : index
    %c2_26 = arith.constant 2 : index
    %c0_27 = arith.constant 0 : index
    %c0_28 = arith.constant 0 : index
    %36 = vector.load %arg3[%c0_25, %c2_26, %c0_27, %c0_28] : memref<1x3x2x128xf32, #tpu.memory_space<vmem>>, vector<1x1x2x128xf32>
    %37 = vector.shape_cast %36 : vector<1x1x2x128xf32> to vector<2x128xf32>
    %38 = vector.shape_cast %35 : vector<2x128xf32> to vector<1x1x2x128xf32>
    tpu.vector_store %arg3[%c0_25, %c2_26, %c0_27, %c0_28], %38 {strides = array<i32>} : memref<1x3x2x128xf32, #tpu.memory_space<vmem>>, vector<1x1x2x128xf32>,
    return
  }
  func.func @transform_0(%arg0: i32, %arg1: i32) -> (i32, i32, i32, i32) {
    %c0_i32 = arith.constant 0 : i32
    %c0_i32_0 = arith.constant 0 : i32
    %c0_i32_1 = arith.constant 0 : i32
    return %arg0, %c0_i32, %arg1, %c0_i32_0 : i32, i32, i32, i32
  }
  func.func @transform_1(%arg0: i32, %arg1: i32) -> (i32, i32, i32, i32) {
    %c0_i32 = arith.constant 0 : i32
    %c0_i32_0 = arith.constant 0 : i32
    %c0_i32_1 = arith.constant 0 : i32
    return %arg0, %c0_i32, %arg1, %c0_i32_0 : i32, i32, i32, i32
  }
}

</mosaic_0001>

<llo_original>
// kernel: tpu_custom_call.1
$region0: #{tpu_custom_call.1}
  #allocation0 [shape = 'u32[]', space=smem, size = 0x4, offset = 0x4, fixed_abs, tag = 'smem constant byte address 0x4 - core index']
  #allocation1 [shape = 'u32[144,128]{1,0:T(1,128)}', space=vmem, size = 0x12000, scoped, tag = 'internal scratch']
  %s0 = inlined_call_operand.hbm [shape: f32[2,3,2,128], index: 0, kind: input, shape index: {}]
  %s1 = inlined_call_operand.hbm [shape: f32[2,3,2,128], index: 1, kind: output, shape index: {}]
  %s2 = sld [smem:[#allocation0]]
  $region41: #{tpu_custom_call.1} parent=0
    _
  %s4 = ssub.s32 1, %s2
  %s5 = scalar_select 0, %s4, %s2
  $region1: #{tpu_custom_call.1} parent=0
    #allocation2 [shape = 'u8[6144]{0}', space=vmem, size = 0x1800, scoped, tag = 'input window, operand 0']
    #allocation3 [shape = 's32[2]{0}', space=sflag, size = 0x8, scoped, tag = 'scoped memory for tpu_custom_call.1']
    #allocation4 [shape = 's32[2]{0}', space=sflag, size = 0x8, scoped, tag = 'scoped memory for tpu_custom_call.1']
    #allocation5 [shape = 'u8[6144]{0}', space=vmem, size = 0x1800, scoped, tag = 'output window, operand 0']
    %6 = vsyncpa [#allocation3], 0
    %s7 = scalar_lea.sflag [#allocation3], 1
    %8 = vsyncpa %s7, 0
    %9 = vsyncpa [#allocation4], 0
    %s10 = scalar_lea.sflag [#allocation4], 1
    %11 = vsyncpa %s10, 0
    loop: start=0, step=1, limit=4
    $region2: #{tpu_custom_call.1} parent=1 // loop_pre_header
      _
    $region3: #{tpu_custom_call.1} parent=1 // loop_header
      %s13 = sphi 0, %s17
      %p14 = scmp.ge.s32.totalorder %s13, 4
      %s20 = sphi 0, %s32
      %s21 = sphi 0, %s28
      %s22 = sphi 0, %s20
      %s23 = sphi 0, %s21
      %s24 = sphi 0, %s22
      %s25 = sphi 0, %s23
      %s37 = sphi 0, %s39
      %s40 = sphi 0, %s37
      %s41 = sphi 0, %s40
      %s57 = sphi 0, %s41
      %s65 = sphi 0, %s67
      %s68 = sphi 0, %s65
      %s69 = sphi 0, %s68
      %s85 = sphi 0, %s69
    $region4: #{tpu_custom_call.1} parent=1 // loop_header_branch
      %16 = sbr.rel (%p14) target = $region8
    $region5: #{tpu_custom_call.1} parent=1 // loop_body
      %s18 = ssub.s32 %s13, 1
      %s19 = ssub.s32 %s13, 2
      %s26 = sadd.s32 1, %s21
      %p27 = scmp.ge.s32.totalorder %s26, 1
      %s28 = scalar_select %p27, 0, %s26
      %s29 = sadd.s32 1, %s20
      %s30 = scalar_select %p27, %s29, %s20
      %p31 = scmp.ge.s32.totalorder %s30, 2
      %s32 = scalar_select %p31, 0, %s30
      %s33 = ssub.s32 %s20, %s32
      %s34 = ssub.s32 %s21, %s28
      %s35 = sor.u32 %s33, %s34
      %p36 = scmp.eq.s32.totalorder %s35, 0
      %s38 = sadd.s32 %s37, 1
      %s39 = scalar_select %p36, %s37, %s38
      %p42 = pneg %p36
      %p43 = scmp.eq.s32.totalorder %s13, 1
      %p44 = por %p42, %p43
      %p45 = scmp.ne.s32.totalorder %s37, %s40
      %p46 = scmp.eq.s32.totalorder %s13, 0
      %p47 = por %p45, %p46
      %p48 = scmp.ne.s32.totalorder %s37, %s40
      %p49 = scmp.eq.s32.totalorder %s18, 1
      %p50 = por %p48, %p49
      %p51 = scmp.ne.s32.totalorder %s40, %s41
      %p52 = scmp.eq.s32.totalorder %s18, 0
      %p53 = por %p51, %p52
      %p54 = scmp.ne.s32.totalorder %s40, %s41
      %p55 = scmp.eq.s32.totalorder %s19, 1
      %p56 = por %p54, %p55
      %p58 = scmp.ne.s32.totalorder %s41, %s57
      %p59 = scmp.eq.s32.totalorder %s19, 0
      %p60 = por %p58, %p59
      %s61 = ssub.s32 %s20, %s32
      %s62 = ssub.s32 %s21, %s28
      %s63 = sor.u32 %s61, %s62
      %p64 = scmp.eq.s32.totalorder %s63, 0
      %s66 = sadd.s32 %s65, 1
      %s67 = scalar_select %p64, %s65, %s66
      %p70 = pneg %p64
      %p71 = scmp.eq.s32.totalorder %s13, 1
      %p72 = por %p70, %p71
      %p73 = scmp.ne.s32.totalorder %s65, %s68
      %p74 = scmp.eq.s32.totalorder %s13, 0
      %p75 = por %p73, %p74
      %p76 = scmp.ne.s32.totalorder %s65, %s68
      %p77 = scmp.eq.s32.totalorder %s18, 1
      %p78 = por %p76, %p77
      %p79 = scmp.ne.s32.totalorder %s68, %s69
      %p80 = scmp.eq.s32.totalorder %s18, 0
      %p81 = por %p79, %p80
      %p82 = scmp.ne.s32.totalorder %s68, %s69
      %p83 = scmp.eq.s32.totalorder %s19, 1
      %p84 = por %p82, %p83
      %p86 = scmp.ne.s32.totalorder %s69, %s85
      %p87 = scmp.eq.s32.totalorder %s19, 0
      %p88 = por %p86, %p87
      %p89 = scmp.le.s32.totalorder 1, %s13
      %p90 = scmp.lt.s32.totalorder %s13, 3
      %p91 = pnand %p89, %p90
      %p92 = pneg %p91
      // Predicated region
      $region9: #{tpu_custom_call.1} parent=5 // pred_check
        _
      $region10: #{tpu_custom_call.1} parent=5 // pred_check_branch
        %94 = sbr.rel (%p91) target = $region12
      $region11: #{tpu_custom_call.1} parent=5 // pred_region
        %s95 = ssub.s32 %s13, 1
      $region12: #{tpu_custom_call.1} parent=5 // pred_fallthru
        _
      %p96 = scmp.lt.s32.totalorder %s13, 2
      // Predicated region
      $region13: #{tpu_custom_call.1} parent=5 // pred_check
        %p97 = pneg %p96
      $region14: #{tpu_custom_call.1} parent=5 // pred_check_branch
        %99 = sbr.rel (%p97) target = $region16
      $region15: #{tpu_custom_call.1} parent=5 // pred_region
        // Predicated region
        $region17: #{tpu_custom_call.1} parent=15 // pred_check
          %p100 = pneg %p47
        $region18: #{tpu_custom_call.1} parent=15 // pred_check_branch
          %102 = sbr.rel (%p100) target = $region20
        $region19: #{tpu_custom_call.1} parent=15 // pred_region
          %s103 = sand.u32 %s37, 1
          %s104 = scalar_lea.sflag [#allocation3], %s103
          %s105 = sand.u32 %s37, 1
          %s106 = smul.addr %s105, 6
          %s107 = scalar_lea.vmem [#allocation2], %s106
          %s109 = ssub.s32 96, 96
          %110 = vsyncadd %s104, %s109
          %s111 = smul.addr %s20, 3
          %s112 = sadd.s32 %s21, %s111
          %s113 = smul.addr %s112, 32
          %s114 = scalar_lea.hbm %s0, %s113
          %s115 = sshll.u32 %s107, 4
          %s116 = int_to_ptr.vmem [resolvable:$true] %s115
          %121 = dma.hbm_to_vmem [thread:$0]  %s114, 96, %s116, %s104, 32, 32, 2
        $region20: #{tpu_custom_call.1} parent=15 // pred_fallthru
          _
      $region16: #{tpu_custom_call.1} parent=5 // pred_fallthru
        _
      %p122 = scmp.le.s32.totalorder 1, %s13
      %p123 = scmp.lt.s32.totalorder %s13, 3
      %p124 = pnand %p122, %p123
      %p125 = pneg %p124
      // Predicated region
      $region21: #{tpu_custom_call.1} parent=5 // pred_check
        _
      $region22: #{tpu_custom_call.1} parent=5 // pred_check_branch
        %127 = sbr.rel (%p124) target = $region24
      $region23: #{tpu_custom_call.1} parent=5 // pred_region
        %s128 = ssub.s32 %s13, 1
        %s129 = sand.u32 %s40, 1
        %s130 = scalar_lea.sflag [#allocation3], %s129
        %s131 = sand.u32 %s40, 1
        %s132 = smul.addr %s131, 6
        %s133 = scalar_lea.vmem [#allocation2], %s132
        // Predicated region
        $region25: #{tpu_custom_call.1} parent=23 // pred_check
          %p134 = pneg %p53
        $region26: #{tpu_custom_call.1} parent=23 // pred_check_branch
          %136 = sbr.rel (%p134) target = $region28
        $region27: #{tpu_custom_call.1} parent=23 // pred_region
          %137 = dma.done %s130, 96
        $region28: #{tpu_custom_call.1} parent=23 // pred_fallthru
          _
        %s138 = sand.u32 %s40, 1
        %s139 = scalar_lea.sflag [#allocation3], %s138
        %s140 = sand.u32 %s40, 1
        %s141 = smul.addr %s140, 6
        %s142 = scalar_lea.vmem [#allocation2], %s141
        %p143 = pneg %p53
        %p144 = pneg %p50
        %p145 = pneg %p81
        %p146 = pneg %p78
        %s147 = sand.u32 %s68, 1
        %s148 = scalar_lea.sflag [#allocation4], %s147
        %s149 = sand.u32 %s68, 1
        %s150 = smul.addr %s149, 6
        %s151 = scalar_lea.vmem [#allocation5], %s150
        %v152 = vld [vmem:[%s133] sm:$0x3]
        %s153 = scalar_lea.vmem %s133, 2 [#allocation2]
        %v154 = vld [vmem:[%s153] sm:$0x3]
        %s155 = scalar_lea.vmem %s133, 4 [#allocation2]
        %v156 = vld [vmem:[%s155] sm:$0x3]
        %v157 = vmul.f32 %v152, 0.299
        %v158 = vmul.f32 %v154, 0.587
        %v159 = vadd.f32 %v157, %v158
        %v160 = vmul.f32 %v156, 0.114
        %v161 = vadd.f32 %v159, %v160
        %162 = vst [vmem:[%s151] sm:$0x3] %v161
        %v163 = vmul.f32 %v152, 0.5969
        %v164 = vmul.f32 %v154, -0.2746
        %v165 = vadd.f32 %v163, %v164
        %v166 = vmul.f32 %v156, -0.3213
        %v167 = vadd.f32 %v165, %v166
        %s168 = scalar_lea.vmem %s151, 2 [#allocation5]
        %169 = vst [vmem:[%s168] sm:$0x3] %v167
        %v170 = vmul.f32 %v152, 0.2115
        %v171 = vmul.f32 %v154, -0.5227
        %v172 = vadd.f32 %v170, %v171
        %v173 = vmul.f32 %v156, 0.3112
        %v174 = vadd.f32 %v172, %v173
        %s175 = scalar_lea.vmem %s151, 4 [#allocation5]
        %176 = vst [vmem:[%s175] sm:$0x3] %v174
        %s177 = sand.u32 %s68, 1
        %s178 = scalar_lea.sflag [#allocation4], %s177
        %s179 = sand.u32 %s68, 1
        %s180 = smul.addr %s179, 6
        %s181 = scalar_lea.vmem [#allocation5], %s180
        // Predicated region
        $region29: #{tpu_custom_call.1} parent=23 // pred_check
          %p182 = pneg %p78
        $region30: #{tpu_custom_call.1} parent=23 // pred_check_branch
          %184 = sbr.rel (%p182) target = $region32
        $region31: #{tpu_custom_call.1} parent=23 // pred_region
          %s186 = ssub.s32 96, 96
          %187 = vsyncadd %s178, %s186
          %s188 = smul.addr %s22, 3
          %s189 = sadd.s32 %s23, %s188
          %s190 = smul.addr %s189, 32
          %s191 = scalar_lea.hbm %s1, %s190
          %s192 = sshll.u32 %s181, 4
          %s193 = int_to_ptr.vmem [resolvable:$true] %s192
          %198 = dma.vmem_to_hbm [thread:$0]  %s193, 96, %s191, %s178, 32, 32, 2
        $region32: #{tpu_custom_call.1} parent=23 // pred_fallthru
          _
      $region24: #{tpu_custom_call.1} parent=5 // pred_fallthru
        _
      %p199 = scmp.le.s32.totalorder 2, %s13
      // Predicated region
      $region33: #{tpu_custom_call.1} parent=5 // pred_check
        %p200 = pneg %p199
      $region34: #{tpu_custom_call.1} parent=5 // pred_check_branch
        %202 = sbr.rel (%p200) target = $region36
      $region35: #{tpu_custom_call.1} parent=5 // pred_region
        %s203 = ssub.s32 %s13, 2
        // Predicated region
        $region37: #{tpu_custom_call.1} parent=35 // pred_check
          %p204 = pneg %p84
        $region38: #{tpu_custom_call.1} parent=35 // pred_check_branch
          %206 = sbr.rel (%p204) target = $region40
        $region39: #{tpu_custom_call.1} parent=35 // pred_region
          %s207 = sand.u32 %s69, 1
          %s208 = scalar_lea.sflag [#allocation4], %s207
          %s209 = sand.u32 %s69, 1
          %s210 = smul.addr %s209, 6
          %s211 = scalar_lea.vmem [#allocation5], %s210
          %212 = dma.done %s208, 96
        $region40: #{tpu_custom_call.1} parent=35 // pred_fallthru
          _
      $region36: #{tpu_custom_call.1} parent=5 // pred_fallthru
        _
    $region6: #{tpu_custom_call.1} parent=1 // loop_footer
      %s17 = sadd.s32 1, %s13
    $region7: #{tpu_custom_call.1} parent=1 // loop_footer_branch
      %12 = sbr.rel target = $region3
    $region8: #{tpu_custom_call.1} parent=1 // loop_exit
      _
    %213 = vsyncpa [#allocation3], 1
    %s214 = scalar_lea.sflag [#allocation3], 1
    %215 = vsyncpa %s214, 1
    %216 = vsyncpa [#allocation4], 1
    %s217 = scalar_lea.sflag [#allocation4], 1
    %218 = vsyncpa %s217, 1

</llo_original>
